<compile_context>
chip_gen: v5e
topology: v5e:2x2
jax: 0.10.0
libtpu: 0.0.40
codegen_flags: <defaults>
</compile_context>

<pallas_src>
import functools

import jax
import jax.numpy as jnp
from jax.experimental import pallas as pl
from jax.experimental.pallas import tpu as pltpu

LANE = 128
SUBLANE = 8


def _round_up(n, m):
    return (n + m - 1) // m * m


def _bf16_elementwise_ok():
    """bf16 VPU/EUP exists on v6e/v7x; keep f32 element-wise math on <= v5."""
    try:
        kind = jax.devices()[0].device_kind.lower()
    except Exception:
        return False
    return not any(tag in kind for tag in ("v2", "v3", "v4", "v5"))


def dnn_kernel(x_ref, w1_ref, b1_ref, w2_ref, b2_ref, w3_ref, b3_ref, o_ref,
               *, num_classes, act_dtype):
    # x arrives f32 (no wrapper-side pre-cast); cast to bf16 on the VPU right
    # before the MXU dot.
    x = x_ref[...].astype(jnp.bfloat16)

    # fc1 (bf16 MXU, f32 acc) + bias + sigmoid.  dropout(p=0.5) -> identity in eval mode.
    h1 = jnp.dot(x, w1_ref[...], preferred_element_type=jnp.float32) + b1_ref[...]
    h1 = jax.nn.sigmoid(h1.astype(act_dtype)).astype(jnp.bfloat16)

    # fc2 + sigmoid.  dropout(p=0.5) -> identity in eval mode.
    h2 = jnp.dot(h1, w2_ref[...], preferred_element_type=jnp.float32) + b2_ref[...]
    h2 = jax.nn.sigmoid(h2.astype(act_dtype)).astype(jnp.bfloat16)

    # fc3: class dim lane-padded in the operands; pad bias cols are -1e30 so
    # they vanish under the f32 log_softmax below.
    logits = jnp.dot(h2, w3_ref[...], preferred_element_type=jnp.float32) + b3_ref[...]

    # log_softmax over the class (lane) axis, in f32.
    m = jnp.max(logits, axis=1, keepdims=True)
    shifted = logits - m
    lse = jnp.log(jnp.sum(jnp.exp(shifted), axis=1, keepdims=True))
    logp = shifted - lse

    # Store only the real classes: 12.8x fewer HBM output bytes than the
    # 128-padded f32 output, and no wrapper-side class slice pass.
    o_ref[...] = logp[:, :num_classes].astype(o_ref.dtype)


def dnn_forward(x, params, *, tb=1024):
    """x: [B, input_size] float32. Returns log-probs [B, num_classes] float32."""
    w1, b1, w2, b2, w3, b3 = params
    B, D_in = x.shape
    H1 = w1.shape[1]
    H2 = w2.shape[1]
    num_classes = w3.shape[1]

    # --- lane-dense class dim for the fc3 operands only ----------------------
    C_pad = _round_up(num_classes, LANE)
    w3p = jnp.pad(w3, ((0, 0), (0, C_pad - num_classes)))
    b3p = jnp.pad(b3, ((0, 0), (0, C_pad - num_classes)), constant_values=-1e30)

    # --- batch tiling: minimal pad (sublane=8 for f32 x), balanced tiles -----
    B8 = _round_up(B, SUBLANE)
    n_steps = pl.cdiv(B8, tb)
    if B8 >= 2 * SUBLANE:
        # >= 2 grid steps so the "parallel" axis can shard across v7x's 2 TCs.
        n_steps = max(n_steps, 2)
    tb_eff = _round_up(pl.cdiv(B8, n_steps), SUBLANE)
    B_pad = tb_eff * n_steps

    xp = jnp.pad(x, ((0, B_pad - B), (0, 0))) if B_pad != B else x  # stays f32

    # --- bf16 matmul weights, f32 biases --------------------------------------
    w1b = w1.astype(jnp.bfloat16)
    w2b = w2.astype(jnp.bfloat16)
    w3b = w3p.astype(jnp.bfloat16)
    b1f = b1.astype(jnp.float32)
    b2f = b2.astype(jnp.float32)
    b3f = b3p.astype(jnp.float32)

    act_dtype = jnp.bfloat16 if _bf16_elementwise_ok() else jnp.float32
    kernel = functools.partial(dnn_kernel, num_classes=num_classes, act_dtype=act_dtype)

    out = pl.pallas_call(
        kernel,
        out_shape=jax.ShapeDtypeStruct((B_pad, num_classes), jnp.float32),
        grid_spec=pltpu.PrefetchScalarGridSpec(
            num_scalar_prefetch=0,
            grid=(n_steps,),
            in_specs=[
                pl.BlockSpec((tb_eff, D_in), lambda i: (i, 0)),   # x tile (f32)
                pl.BlockSpec((D_in, H1), lambda i: (0, 0)),       # w1
                pl.BlockSpec((1, H1), lambda i: (0, 0)),          # b1
                pl.BlockSpec((H1, H2), lambda i: (0, 0)),         # w2
                pl.BlockSpec((1, H2), lambda i: (0, 0)),          # b2
                pl.BlockSpec((H2, C_pad), lambda i: (0, 0)),      # w3 (lane-padded)
                pl.BlockSpec((1, C_pad), lambda i: (0, 0)),       # b3 (lane-padded)
            ],
            out_specs=pl.BlockSpec((tb_eff, num_classes), lambda i: (i, 0)),
        ),
        compiler_params=pltpu.CompilerParams(
            dimension_semantics=("parallel",)),
    )(xp, w1b, b1f, w2b, b2f, w3b, b3f)

    return out if B_pad == B else out[:B]


def init_params(key, input_size, num_classes):
    """Deterministic init mirroring nn.Linear's uniform(-1/sqrt(fan_in), ...)."""
    def linear(k, fan_in, fan_out):
        kw, kb = jax.random.split(k)
        bound = 1.0 / jnp.sqrt(fan_in)
        w = jax.random.uniform(kw, (fan_in, fan_out), jnp.float32, -bound, bound)
        b = jax.random.uniform(kb, (1, fan_out), jnp.float32, -bound, bound)
        return w, b

    k1, k2, k3 = jax.random.split(key, 3)
    w1, b1 = linear(k1, input_size, 128)
    w2, b2 = linear(k2, 128, 128)
    w3, b3 = linear(k3, 128, num_classes)
    return (w1, b1, w2, b2, w3, b3)


if __name__ == "__main__":
    key = jax.random.PRNGKey(0)
    k_params, k_x = jax.random.split(key)

    batch, input_size, num_classes = 16, 32, 10
    params = init_params(k_params, input_size, num_classes)
    x = jax.random.normal(k_x, (batch, input_size), jnp.float32)

    out = dnn_forward(x, params)
    out = jax.block_until_ready(out)
    assert out.shape == (batch, num_classes)

    # sanity check vs pure-JAX f32 reference (loose tol: bf16 MXU operands and
    # optional bf16 element-wise path)
    w1, b1, w2, b2, w3, b3 = params
    h1 = jax.nn.sigmoid(x @ w1 + b1)
    h2 = jax.nn.sigmoid(h1 @ w2 + b2)
    ref = jax.nn.log_softmax(h2 @ w3 + b3, axis=1)
    assert jnp.allclose(out, ref, atol=5e-2, rtol=5e-2), "mismatch vs reference"

    print("KERNEL_OK")
</pallas_src>

<mosaic_0001>
module attributes {stable_mosaic.version = 11 : i64} {
  func.func @dnn_kernel(%arg0: i32, %arg1: memref<8x32xf32, #tpu.memory_space<vmem>>, %arg2: memref<32x128xbf16, #tpu.memory_space<vmem>>, %arg3: memref<1x128xf32, #tpu.memory_space<vmem>>, %arg4: memref<128x128xbf16, #tpu.memory_space<vmem>>, %arg5: memref<1x128xf32, #tpu.memory_space<vmem>>, %arg6: memref<128x128xbf16, #tpu.memory_space<vmem>>, %arg7: memref<1x128xf32, #tpu.memory_space<vmem>>, %arg8: memref<8x10xf32, #tpu.memory_space<vmem>>) attributes {dimension_semantics = [#tpu.dimension_semantics<parallel>], iteration_bounds = array<i64: 2>, scalar_prefetch = 0 : i64, scratch_operands = 0 : i64, tpu.core_type = #tpu.core_type<tc>, window_params = [{transform_indices = @transform_0, window_bounds = array<i64: 8, 32>}, {pipeline_mode = #tpu.pipeline_mode<synchronous>, transform_indices = @transform_1, window_bounds = array<i64: 32, 128>}, {pipeline_mode = #tpu.pipeline_mode<synchronous>, transform_indices = @transform_2, window_bounds = array<i64: 1, 128>}, {pipeline_mode = #tpu.pipeline_mode<synchronous>, transform_indices = @transform_3, window_bounds = array<i64: 128, 128>}, {pipeline_mode = #tpu.pipeline_mode<synchronous>, transform_indices = @transform_4, window_bounds = array<i64: 1, 128>}, {pipeline_mode = #tpu.pipeline_mode<synchronous>, transform_indices = @transform_5, window_bounds = array<i64: 128, 128>}, {pipeline_mode = #tpu.pipeline_mode<synchronous>, transform_indices = @transform_6, window_bounds = array<i64: 1, 128>}, {transform_indices = @transform_7, window_bounds = array<i64: 8, 10>}]} {
    %c0 = arith.constant 0 : index
    %c0_0 = arith.constant 0 : index
    %0 = vector.load %arg1[%c0, %c0_0] : memref<8x32xf32, #tpu.memory_space<vmem>>, vector<8x32xf32>
    %1 = arith.truncf %0 : vector<8x32xf32> to vector<8x32xbf16>
    %c0_1 = arith.constant 0 : index
    %c0_2 = arith.constant 0 : index
    %2 = vector.load %arg2[%c0_1, %c0_2] : memref<32x128xbf16, #tpu.memory_space<vmem>>, vector<32x128xbf16>
    %cst = arith.constant dense<0.000000e+00> : vector<8x128xf32>
    %3 = tpu.matmul %1, %2, %cst {dimension_numbers = #tpu.dot_dimension_numbers<[1], [0], [0], [1], [0, 0, 1, 1], [], []>} : vector<8x32xbf16>, vector<32x128xbf16>, vector<8x128xf32> -> vector<8x128xf32>
    %c0_3 = arith.constant 0 : index
    %c0_4 = arith.constant 0 : index
    %4 = vector.load %arg3[%c0_3, %c0_4] : memref<1x128xf32, #tpu.memory_space<vmem>>, vector<1x128xf32>
    %5 = vector.broadcast %4 : vector<1x128xf32> to vector<8x128xf32>
    %6 = arith.addf %3, %5 : vector<8x128xf32>
    %7 = arith.truncf %6 : vector<8x128xf32> to vector<8x128xbf16>
    %8 = arith.negf %7 : vector<8x128xbf16>
    %9 = math.exp %8 : vector<8x128xbf16>
    %cst_5 = arith.constant 1.000000e+00 : bf16
    %10 = vector.broadcast %cst_5 : bf16 to vector<8x128xbf16>
    %11 = arith.addf %10, %9 : vector<8x128xbf16>
    %12 = arith.divf %10, %11 : vector<8x128xbf16>
    %c0_6 = arith.constant 0 : index
    %c0_7 = arith.constant 0 : index
    %13 = vector.load %arg4[%c0_6, %c0_7] : memref<128x128xbf16, #tpu.memory_space<vmem>>, vector<128x128xbf16>
    %cst_8 = arith.constant dense<0.000000e+00> : vector<8x128xf32>
    %14 = tpu.matmul %12, %13, %cst_8 {dimension_numbers = #tpu.dot_dimension_numbers<[1], [0], [0], [1], [0, 0, 1, 1], [], []>} : vector<8x128xbf16>, vector<128x128xbf16>, vector<8x128xf32> -> vector<8x128xf32>
    %c0_9 = arith.constant 0 : index
    %c0_10 = arith.constant 0 : index
    %15 = vector.load %arg5[%c0_9, %c0_10] : memref<1x128xf32, #tpu.memory_space<vmem>>, vector<1x128xf32>
    %16 = vector.broadcast %15 : vector<1x128xf32> to vector<8x128xf32>
    %17 = arith.addf %14, %16 : vector<8x128xf32>
    %18 = arith.truncf %17 : vector<8x128xf32> to vector<8x128xbf16>
    %19 = arith.negf %18 : vector<8x128xbf16>
    %20 = math.exp %19 : vector<8x128xbf16>
    %cst_11 = arith.constant 1.000000e+00 : bf16
    %21 = vector.broadcast %cst_11 : bf16 to vector<8x128xbf16>
    %22 = arith.addf %21, %20 : vector<8x128xbf16>
    %23 = arith.divf %21, %22 : vector<8x128xbf16>
    %c0_12 = arith.constant 0 : index
    %c0_13 = arith.constant 0 : index
    %24 = vector.load %arg6[%c0_12, %c0_13] : memref<128x128xbf16, #tpu.memory_space<vmem>>, vector<128x128xbf16>
    %cst_14 = arith.constant dense<0.000000e+00> : vector<8x128xf32>
    %25 = tpu.matmul %23, %24, %cst_14 {dimension_numbers = #tpu.dot_dimension_numbers<[1], [0], [0], [1], [0, 0, 1, 1], [], []>} : vector<8x128xbf16>, vector<128x128xbf16>, vector<8x128xf32> -> vector<8x128xf32>
    %c0_15 = arith.constant 0 : index
    %c0_16 = arith.constant 0 : index
    %26 = vector.load %arg7[%c0_15, %c0_16] : memref<1x128xf32, #tpu.memory_space<vmem>>, vector<1x128xf32>
    %27 = vector.broadcast %26 : vector<1x128xf32> to vector<8x128xf32>
    %28 = arith.addf %25, %27 : vector<8x128xf32>
    %cst_17 = arith.constant dense<0xFF800000> : vector<8xf32>
    %29 = vector.multi_reduction <maximumf>, %28, %cst_17 [1] : vector<8x128xf32> to vector<8xf32>
    %30 = vector.shape_cast %29 : vector<8xf32> to vector<8x1xf32>
    %31 = vector.broadcast %30 : vector<8x1xf32> to vector<8x128xf32>
    %32 = arith.subf %28, %31 : vector<8x128xf32>
    %33 = math.exp %32 : vector<8x128xf32>
    %cst_18 = arith.constant dense<0.000000e+00> : vector<8xf32>
    %34 = vector.multi_reduction <add>, %33, %cst_18 [1] : vector<8x128xf32> to vector<8xf32>
    %35 = vector.shape_cast %34 : vector<8xf32> to vector<8x1xf32>
    %36 = math.log %35 : vector<8x1xf32>
    %37 = vector.broadcast %36 : vector<8x1xf32> to vector<8x128xf32>
    %38 = arith.subf %32, %37 : vector<8x128xf32>
    %39 = vector.extract_strided_slice %38 {offsets = [0, 0], sizes = [8, 10], strides = [1, 1]} : vector<8x128xf32> to vector<8x10xf32>
    %c0_19 = arith.constant 0 : index
    %c0_20 = arith.constant 0 : index
    %40 = vector.load %arg8[%c0_19, %c0_20] : memref<8x10xf32, #tpu.memory_space<vmem>>, vector<8x10xf32>
    tpu.vector_store %arg8[%c0_19, %c0_20], %39 {strides = array<i32>} : memref<8x10xf32, #tpu.memory_space<vmem>>, vector<8x10xf32>,
    return
  }
  func.func @transform_0(%arg0: i32) -> (i32, i32) {
    %c0_i32 = arith.constant 0 : i32
    %c0_i32_0 = arith.constant 0 : i32
    return %arg0, %c0_i32 : i32, i32
  }
  func.func @transform_1(%arg0: i32) -> (i32, i32) {
    %c0_i32 = arith.constant 0 : i32
    %c0_i32_0 = arith.constant 0 : i32
    %c0_i32_1 = arith.constant 0 : i32
    return %c0_i32, %c0_i32_0 : i32, i32
  }
  func.func @transform_2(%arg0: i32) -> (i32, i32) {
    %c0_i32 = arith.constant 0 : i32
    %c0_i32_0 = arith.constant 0 : i32
    %c0_i32_1 = arith.constant 0 : i32
    return %c0_i32, %c0_i32_0 : i32, i32
  }
  func.func @transform_3(%arg0: i32) -> (i32, i32) {
    %c0_i32 = arith.constant 0 : i32
    %c0_i32_0 = arith.constant 0 : i32
    %c0_i32_1 = arith.constant 0 : i32
    return %c0_i32, %c0_i32_0 : i32, i32
  }
  func.func @transform_4(%arg0: i32) -> (i32, i32) {
    %c0_i32 = arith.constant 0 : i32
    %c0_i32_0 = arith.constant 0 : i32
    %c0_i32_1 = arith.constant 0 : i32
    return %c0_i32, %c0_i32_0 : i32, i32
  }
  func.func @transform_5(%arg0: i32) -> (i32, i32) {
    %c0_i32 = arith.constant 0 : i32
    %c0_i32_0 = arith.constant 0 : i32
    %c0_i32_1 = arith.constant 0 : i32
    return %c0_i32, %c0_i32_0 : i32, i32
  }
  func.func @transform_6(%arg0: i32) -> (i32, i32) {
    %c0_i32 = arith.constant 0 : i32
    %c0_i32_0 = arith.constant 0 : i32
    %c0_i32_1 = arith.constant 0 : i32
    return %c0_i32, %c0_i32_0 : i32, i32
  }
  func.func @transform_7(%arg0: i32) -> (i32, i32) {
    %c0_i32 = arith.constant 0 : i32
    %c0_i32_0 = arith.constant 0 : i32
    return %arg0, %c0_i32 : i32, i32
  }
}

</mosaic_0001>

<llo_original>
// kernel: tpu_custom_call.1
$region0: #{tpu_custom_call.1}
  #allocation0 [shape = 'u32[]', space=smem, size = 0x4, offset = 0x4, fixed_abs, tag = 'smem constant byte address 0x4 - core index']
  #allocation1 [shape = 'u32[72,128]{1,0:T(1,128)}', space=vmem, size = 0x9000, scoped, tag = 'internal scratch']
  %s0 = inlined_call_operand.hbm [shape: f32[16,32], index: 0, kind: input, shape index: {}]
  %s1 = inlined_call_operand.hbm [shape: bf16[32,128], index: 1, kind: input, shape index: {}]
  %s2 = inlined_call_operand.vmem [shape: f32[1,128], index: 2, kind: input, shape index: {}]
  %s3 = inlined_call_operand.hbm [shape: bf16[128,128], index: 3, kind: input, shape index: {}]
  %s4 = inlined_call_operand.vmem [shape: f32[1,128], index: 4, kind: input, shape index: {}]
  %s5 = inlined_call_operand.hbm [shape: bf16[128,128], index: 5, kind: input, shape index: {}]
  %s6 = inlined_call_operand.vmem [shape: f32[1,128], index: 6, kind: input, shape index: {}]
  %s7 = inlined_call_operand.hbm [shape: f32[16,10], index: 7, kind: output, shape index: {}]
  %s8 = sld [smem:[#allocation0]]
  $region77: #{tpu_custom_call.1} parent=0
    _
  %s10 = ssub.s32 1, %s8
  %s11 = scalar_select 0, %s10, %s8
  $region1: #{tpu_custom_call.1} parent=0
    #allocation2 [shape = 'u8[8192]{0}', space=vmem, size = 0x2000, scoped, tag = 'input window, operand 0']
    #allocation3 [shape = 's32[2]{0}', space=sflag, size = 0x8, scoped, tag = 'scoped memory for tpu_custom_call.1']
    #allocation4 [shape = 's32[2]{0}', space=sflag, size = 0x8, scoped, tag = 'scoped memory for tpu_custom_call.1']
    #allocation5 [shape = 'u8[8192]{0}', space=vmem, size = 0x2000, scoped, tag = 'input window, operand 1, single buffered']
    #allocation6 [shape = 's32[1]{0}', space=sflag, size = 0x4, scoped, tag = 'scoped memory for tpu_custom_call.1']
    #allocation7 [shape = 'u8[32768]{0}', space=vmem, size = 0x8000, scoped, tag = 'input window, operand 3, single buffered']
    #allocation8 [shape = 'u8[32768]{0}', space=vmem, size = 0x8000, scoped, tag = 'input window, operand 5, single buffered']
    #allocation9 [shape = 's32[1]{0}', space=sflag, size = 0x4, scoped, tag = 'scoped memory for tpu_custom_call.1']
    #allocation10 [shape = 'u8[8192]{0}', space=vmem, size = 0x2000, scoped, tag = 'output window, operand 0']
    %12 = vsyncpa [#allocation3], 0
    %s13 = scalar_lea.sflag [#allocation3], 1
    %14 = vsyncpa %s13, 0
    %15 = vsyncpa [#allocation6], 0
    %16 = vsyncpa [#allocation9], 0
    %17 = vsyncpa [#allocation4], 0
    %s18 = scalar_lea.sflag [#allocation4], 1
    %19 = vsyncpa %s18, 0
    loop: start=0, step=1, limit=4
    $region2: #{tpu_custom_call.1} parent=1 // loop_pre_header
      _
    $region3: #{tpu_custom_call.1} parent=1 // loop_header
      %s21 = sphi 0, %s25
      %p22 = scmp.ge.s32.totalorder %s21, 4
      %s31 = sphi 0, %s33
      %s34 = sphi 0, %s31
      %s35 = sphi 0, %s34
      %s51 = sphi 0, %s35
      %s55 = sphi 0, %s55
      %s57 = sphi 0, %s55
      %s58 = sphi 0, %s57
      %s72 = sphi 0, %s58
      %s76 = sphi 0, %s76
      %s78 = sphi 0, %s76
      %s79 = sphi 0, %s78
      %s93 = sphi 0, %s79
      %s97 = sphi 0, %s97
      %s99 = sphi 0, %s97
      %s100 = sphi 0, %s99
      %s114 = sphi 0, %s100
      %s118 = sphi 0, %s118
      %s120 = sphi 0, %s118
      %s121 = sphi 0, %s120
      %s135 = sphi 0, %s121
      %s139 = sphi 0, %s139
      %s141 = sphi 0, %s139
      %s142 = sphi 0, %s141
      %s156 = sphi 0, %s142
      %s160 = sphi 0, %s160
      %s162 = sphi 0, %s160
      %s163 = sphi 0, %s162
      %s177 = sphi 0, %s163
      %s183 = sphi 0, %s185
      %s186 = sphi 0, %s183
      %s187 = sphi 0, %s186
      %s203 = sphi 0, %s187
    $region4: #{tpu_custom_call.1} parent=1 // loop_header_branch
      %24 = sbr.rel (%p22) target = $region8
    $region5: #{tpu_custom_call.1} parent=1 // loop_body
      %s26 = ssub.s32 %s21, 1
      %s27 = ssub.s32 %s21, 2
      %s28 = sadd.s32 %s21, 1
      %s29 = ssub.s32 %s21, %s28
      %p30 = scmp.eq.s32.totalorder %s29, 0
      %s32 = sadd.s32 %s31, 1
      %s33 = scalar_select %p30, %s31, %s32
      %p36 = pneg %p30
      %p37 = scmp.eq.s32.totalorder %s21, 1
      %p38 = por %p36, %p37
      %p39 = scmp.ne.s32.totalorder %s31, %s34
      %p40 = scmp.eq.s32.totalorder %s21, 0
      %p41 = por %p39, %p40
      %p42 = scmp.ne.s32.totalorder %s31, %s34
      %p43 = scmp.eq.s32.totalorder %s26, 1
      %p44 = por %p42, %p43
      %p45 = scmp.ne.s32.totalorder %s34, %s35
      %p46 = scmp.eq.s32.totalorder %s26, 0
      %p47 = por %p45, %p46
      %p48 = scmp.ne.s32.totalorder %s34, %s35
      %p49 = scmp.eq.s32.totalorder %s27, 1
      %p50 = por %p48, %p49
      %p52 = scmp.ne.s32.totalorder %s35, %s51
      %p53 = scmp.eq.s32.totalorder %s27, 0
      %p54 = por %p52, %p53
      %s56 = sadd.s32 %s55, 1
      %p59 = scmp.eq.s32.totalorder %s21, 1
      %p60 = scmp.ne.s32.totalorder %s55, %s57
      %p61 = scmp.eq.s32.totalorder %s21, 0
      %p62 = por %p60, %p61
      %p63 = scmp.ne.s32.totalorder %s55, %s57
      %p64 = scmp.eq.s32.totalorder %s26, 1
      %p65 = por %p63, %p64
      %p66 = scmp.ne.s32.totalorder %s57, %s58
      %p67 = scmp.eq.s32.totalorder %s26, 0
      %p68 = por %p66, %p67
      %p69 = scmp.ne.s32.totalorder %s57, %s58
      %p70 = scmp.eq.s32.totalorder %s27, 1
      %p71 = por %p69, %p70
      %p73 = scmp.ne.s32.totalorder %s58, %s72
      %p74 = scmp.eq.s32.totalorder %s27, 0
      %p75 = por %p73, %p74
      %s77 = sadd.s32 %s76, 1
      %p80 = scmp.eq.s32.totalorder %s21, 1
      %p81 = scmp.ne.s32.totalorder %s76, %s78
      %p82 = scmp.eq.s32.totalorder %s21, 0
      %p83 = por %p81, %p82
      %p84 = scmp.ne.s32.totalorder %s76, %s78
      %p85 = scmp.eq.s32.totalorder %s26, 1
      %p86 = por %p84, %p85
      %p87 = scmp.ne.s32.totalorder %s78, %s79
      %p88 = scmp.eq.s32.totalorder %s26, 0
      %p89 = por %p87, %p88
      %p90 = scmp.ne.s32.totalorder %s78, %s79
      %p91 = scmp.eq.s32.totalorder %s27, 1
      %p92 = por %p90, %p91
      %p94 = scmp.ne.s32.totalorder %s79, %s93
      %p95 = scmp.eq.s32.totalorder %s27, 0
      %p96 = por %p94, %p95
      %s98 = sadd.s32 %s97, 1
      %p101 = scmp.eq.s32.totalorder %s21, 1
      %p102 = scmp.ne.s32.totalorder %s97, %s99
      %p103 = scmp.eq.s32.totalorder %s21, 0
      %p104 = por %p102, %p103
      %p105 = scmp.ne.s32.totalorder %s97, %s99
      %p106 = scmp.eq.s32.totalorder %s26, 1
      %p107 = por %p105, %p106
      %p108 = scmp.ne.s32.totalorder %s99, %s100
      %p109 = scmp.eq.s32.totalorder %s26, 0
      %p110 = por %p108, %p109
      %p111 = scmp.ne.s32.totalorder %s99, %s100
      %p112 = scmp.eq.s32.totalorder %s27, 1
      %p113 = por %p111, %p112
      %p115 = scmp.ne.s32.totalorder %s100, %s114
      %p116 = scmp.eq.s32.totalorder %s27, 0
      %p117 = por %p115, %p116
      %s119 = sadd.s32 %s118, 1
      %p122 = scmp.eq.s32.totalorder %s21, 1
      %p123 = scmp.ne.s32.totalorder %s118, %s120
      %p124 = scmp.eq.s32.totalorder %s21, 0
      %p125 = por %p123, %p124
      %p126 = scmp.ne.s32.totalorder %s118, %s120
      %p127 = scmp.eq.s32.totalorder %s26, 1
      %p128 = por %p126, %p127
      %p129 = scmp.ne.s32.totalorder %s120, %s121
      %p130 = scmp.eq.s32.totalorder %s26, 0
      %p131 = por %p129, %p130
      %p132 = scmp.ne.s32.totalorder %s120, %s121
      %p133 = scmp.eq.s32.totalorder %s27, 1
      %p134 = por %p132, %p133
      %p136 = scmp.ne.s32.totalorder %s121, %s135
      %p137 = scmp.eq.s32.totalorder %s27, 0
      %p138 = por %p136, %p137
      %s140 = sadd.s32 %s139, 1
      %p143 = scmp.eq.s32.totalorder %s21, 1
      %p144 = scmp.ne.s32.totalorder %s139, %s141
      %p145 = scmp.eq.s32.totalorder %s21, 0
      %p146 = por %p144, %p145
      %p147 = scmp.ne.s32.totalorder %s139, %s141
      %p148 = scmp.eq.s32.totalorder %s26, 1
      %p149 = por %p147, %p148
      %p150 = scmp.ne.s32.totalorder %s141, %s142
      %p151 = scmp.eq.s32.totalorder %s26, 0
      %p152 = por %p150, %p151
      %p153 = scmp.ne.s32.totalorder %s141, %s142
      %p154 = scmp.eq.s32.totalorder %s27, 1
      %p155 = por %p153, %p154
      %p157 = scmp.ne.s32.totalorder %s142, %s156
      %p158 = scmp.eq.s32.totalorder %s27, 0
      %p159 = por %p157, %p158
      %s161 = sadd.s32 %s160, 1
      %p164 = scmp.eq.s32.totalorder %s21, 1
      %p165 = scmp.ne.s32.totalorder %s160, %s162
      %p166 = scmp.eq.s32.totalorder %s21, 0
      %p167 = por %p165, %p166
      %p168 = scmp.ne.s32.totalorder %s160, %s162
      %p169 = scmp.eq.s32.totalorder %s26, 1
      %p170 = por %p168, %p169
      %p171 = scmp.ne.s32.totalorder %s162, %s163
      %p172 = scmp.eq.s32.totalorder %s26, 0
      %p173 = por %p171, %p172
      %p174 = scmp.ne.s32.totalorder %s162, %s163
      %p175 = scmp.eq.s32.totalorder %s27, 1
      %p176 = por %p174, %p175
      %p178 = scmp.ne.s32.totalorder %s163, %s177
      %p179 = scmp.eq.s32.totalorder %s27, 0
      %p180 = por %p178, %p179
      %s181 = ssub.s32 %s21, %s28
      %p182 = scmp.eq.s32.totalorder %s181, 0
      %s184 = sadd.s32 %s183, 1
      %s185 = scalar_select %p182, %s183, %s184
      %p188 = pneg %p182
      %p189 = scmp.eq.s32.totalorder %s21, 1
      %p190 = por %p188, %p189
      %p191 = scmp.ne.s32.totalorder %s183, %s186
      %p192 = scmp.eq.s32.totalorder %s21, 0
      %p193 = por %p191, %p192
      %p194 = scmp.ne.s32.totalorder %s183, %s186
      %p195 = scmp.eq.s32.totalorder %s26, 1
      %p196 = por %p194, %p195
      %p197 = scmp.ne.s32.totalorder %s186, %s187
      %p198 = scmp.eq.s32.totalorder %s26, 0
      %p199 = por %p197, %p198
      %p200 = scmp.ne.s32.totalorder %s186, %s187
      %p201 = scmp.eq.s32.totalorder %s27, 1
      %p202 = por %p200, %p201
      %p204 = scmp.ne.s32.totalorder %s187, %s203
      %p205 = scmp.eq.s32.totalorder %s27, 0
      %p206 = por %p204, %p205
      %p207 = scmp.le.s32.totalorder 1, %s21
      %p208 = scmp.lt.s32.totalorder %s21, 3
      %p209 = pnand %p207, %p208
      %p210 = pneg %p209
      // Predicated region
      $region9: #{tpu_custom_call.1} parent=5 // pred_check
        _
      $region10: #{tpu_custom_call.1} parent=5 // pred_check_branch
        %212 = sbr.rel (%p209) target = $region12
      $region11: #{tpu_custom_call.1} parent=5 // pred_region
        %s213 = ssub.s32 %s21, 1
        // Predicated region
        $region13: #{tpu_custom_call.1} parent=11 // pred_check
          %p214 = pneg %p68
        $region14: #{tpu_custom_call.1} parent=11 // pred_check_branch
          %216 = sbr.rel (%p214) target = $region16
        $region15: #{tpu_custom_call.1} parent=11 // pred_region
          %218 = vsyncadd [#allocation6], 0
          %s219 = sshll.u32 %s1, 4
          %s220 = int_to_ptr.hbm [resolvable:$true] %s219
          %s221 = sshll.u32 [#allocation5], 4
          %s222 = int_to_ptr.vmem [resolvable:$true] %s221
          %227 = dma.hbm_to_vmem [thread:$0]  %s220, 256, %s222, [#allocation6], 64, 64, 4
        $region16: #{tpu_custom_call.1} parent=11 // pred_fallthru
          _
        // Predicated region
        $region17: #{tpu_custom_call.1} parent=11 // pred_check
          %p228 = pneg %p89
        $region18: #{tpu_custom_call.1} parent=11 // pred_check_branch
          %230 = sbr.rel (%p228) target = $region20
        $region19: #{tpu_custom_call.1} parent=11 // pred_region
          _
        $region20: #{tpu_custom_call.1} parent=11 // pred_fallthru
          _
        // Predicated region
        $region21: #{tpu_custom_call.1} parent=11 // pred_check
          %p231 = pneg %p110
        $region22: #{tpu_custom_call.1} parent=11 // pred_check_branch
          %233 = sbr.rel (%p231) target = $region24
        $region23: #{tpu_custom_call.1} parent=11 // pred_region
          %235 = vsyncadd [#allocation6], 0
          %s236 = sshll.u32 %s3, 4
          %s237 = int_to_ptr.hbm [resolvable:$true] %s236
          %s238 = sshll.u32 [#allocation7], 4
          %s239 = int_to_ptr.vmem [resolvable:$true] %s238
          %244 = dma.hbm_to_vmem [thread:$0]  %s237, 1024, %s239, [#allocation6], 64, 64, 4
        $region24: #{tpu_custom_call.1} parent=11 // pred_fallthru
          _
        // Predicated region
        $region25: #{tpu_custom_call.1} parent=11 // pred_check
          %p245 = pneg %p131
        $region26: #{tpu_custom_call.1} parent=11 // pred_check_branch
          %247 = sbr.rel (%p245) target = $region28
        $region27: #{tpu_custom_call.1} parent=11 // pred_region
          _
        $region28: #{tpu_custom_call.1} parent=11 // pred_fallthru
          _
        // Predicated region
        $region29: #{tpu_custom_call.1} parent=11 // pred_check
          %p248 = pneg %p152
        $region30: #{tpu_custom_call.1} parent=11 // pred_check_branch
          %250 = sbr.rel (%p248) target = $region32
        $region31: #{tpu_custom_call.1} parent=11 // pred_region
          %252 = vsyncadd [#allocation9], 0
          %s253 = sshll.u32 %s5, 4
          %s254 = int_to_ptr.hbm [resolvable:$true] %s253
          %s255 = sshll.u32 [#allocation8], 4
          %s256 = int_to_ptr.vmem [resolvable:$true] %s255
          %261 = dma.hbm_to_vmem [thread:$0]  %s254, 1024, %s256, [#allocation9], 64, 64, 4
        $region32: #{tpu_custom_call.1} parent=11 // pred_fallthru
          _
        // Predicated region
        $region33: #{tpu_custom_call.1} parent=11 // pred_check
          %p262 = pneg %p173
        $region34: #{tpu_custom_call.1} parent=11 // pred_check_branch
          %264 = sbr.rel (%p262) target = $region36
        $region35: #{tpu_custom_call.1} parent=11 // pred_region
          _
        $region36: #{tpu_custom_call.1} parent=11 // pred_fallthru
          _
      $region12: #{tpu_custom_call.1} parent=5 // pred_fallthru
        _
      %p265 = scmp.lt.s32.totalorder %s21, 2
      // Predicated region
      $region37: #{tpu_custom_call.1} parent=5 // pred_check
        %p266 = pneg %p265
      $region38: #{tpu_custom_call.1} parent=5 // pred_check_branch
        %268 = sbr.rel (%p266) target = $region40
      $region39: #{tpu_custom_call.1} parent=5 // pred_region
        // Predicated region
        $region41: #{tpu_custom_call.1} parent=39 // pred_check
          %p269 = pneg %p41
        $region42: #{tpu_custom_call.1} parent=39 // pred_check_branch
          %271 = sbr.rel (%p269) target = $region44
        $region43: #{tpu_custom_call.1} parent=39 // pred_region
          %s272 = sand.u32 %s31, 1
          %s273 = scalar_lea.sflag [#allocation3], %s272
          %s274 = sand.u32 %s31, 1
          %s275 = smul.addr %s274, 8
          %s276 = scalar_lea.vmem [#allocation2], %s275
          %278 = vsyncadd %s273, 0
          %s279 = smul.addr %s21, 8
          %s280 = scalar_lea.hbm %s0, %s279
          %s282 = sshll.u32 %s280, 4
          %s283 = int_to_ptr.hbm [resolvable:$true] %s282
          %s284 = sshll.u32 %s276, 4
          %s285 = int_to_ptr.vmem [resolvable:$true] %s284
          %287 = dma.hbm_to_vmem [thread:$0]  %s283, 128, %s285, %s273
        $region44: #{tpu_custom_call.1} parent=39 // pred_fallthru
          _
      $region40: #{tpu_custom_call.1} parent=5 // pred_fallthru
        _
      %p288 = scmp.le.s32.totalorder 1, %s21
      %p289 = scmp.lt.s32.totalorder %s21, 3
      %p290 = pnand %p288, %p289
      %p291 = pneg %p290
      // Predicated region
      $region45: #{tpu_custom_call.1} parent=5 // pred_check
        _
      $region46: #{tpu_custom_call.1} parent=5 // pred_check_branch
        %293 = sbr.rel (%p290) target = $region48
      $region47: #{tpu_custom_call.1} parent=5 // pred_region
        %s294 = ssub.s32 %s21, 1
        %s295 = sand.u32 %s34, 1
        %s296 = scalar_lea.sflag [#allocation3], %s295
        %s297 = sand.u32 %s34, 1
        %s298 = smul.addr %s297, 8
        %s299 = scalar_lea.vmem [#allocation2], %s298
        // Predicated region
        $region49: #{tpu_custom_call.1} parent=47 // pred_check
          %p300 = pneg %p47
        $region50: #{tpu_custom_call.1} parent=47 // pred_check_branch
          %302 = sbr.rel (%p300) target = $region52
        $region51: #{tpu_custom_call.1} parent=47 // pred_region
          %304 = dma.done %s296, 128
        $region52: #{tpu_custom_call.1} parent=47 // pred_fallthru
          _
        // Predicated region
        $region53: #{tpu_custom_call.1} parent=47 // pred_check
          %p305 = pneg %p68
        $region54: #{tpu_custom_call.1} parent=47 // pred_check_branch
          %307 = sbr.rel (%p305) target = $region56
        $region55: #{tpu_custom_call.1} parent=47 // pred_region
          %309 = dma.done [#allocation6], 256
        $region56: #{tpu_custom_call.1} parent=47 // pred_fallthru
          _
        // Predicated region
        $region57: #{tpu_custom_call.1} parent=47 // pred_check
          %p310 = pneg %p110
        $region58: #{tpu_custom_call.1} parent=47 // pred_check_branch
          %312 = sbr.rel (%p310) target = $region60
        $region59: #{tpu_custom_call.1} parent=47 // pred_region
          %314 = dma.done [#allocation6], 1024
        $region60: #{tpu_custom_call.1} parent=47 // pred_fallthru
          _
        // Predicated region
        $region61: #{tpu_custom_call.1} parent=47 // pred_check
          %p315 = pneg %p152
        $region62: #{tpu_custom_call.1} parent=47 // pred_check_branch
          %317 = sbr.rel (%p315) target = $region64
        $region63: #{tpu_custom_call.1} parent=47 // pred_region
          %319 = dma.done [#allocation9], 1024
        $region64: #{tpu_custom_call.1} parent=47 // pred_fallthru
          _
        %s320 = sand.u32 %s34, 1
        %s321 = scalar_lea.sflag [#allocation3], %s320
        %s322 = sand.u32 %s34, 1
        %s323 = smul.addr %s322, 8
        %s324 = scalar_lea.vmem [#allocation2], %s323
        %p325 = pneg %p47
        %p326 = pneg %p44
        %p327 = pneg %p68
        %p328 = pneg %p65
        %p329 = pneg %p89
        %p330 = pneg %p86
        %p331 = pneg %p110
        %p332 = pneg %p107
        %p333 = pneg %p131
        %p334 = pneg %p128
        %p335 = pneg %p152
        %p336 = pneg %p149
        %p337 = pneg %p173
        %p338 = pneg %p170
        %p339 = pneg %p199
        %p340 = pneg %p196
        %s341 = sand.u32 %s186, 1
        %s342 = scalar_lea.sflag [#allocation4], %s341
        %s343 = sand.u32 %s186, 1
        %s344 = smul.addr %s343, 8
        %s345 = scalar_lea.vmem [#allocation10], %s344
        %v348 = vld [vmem:[%s299] sm:$0xff]
        %v349 = vpack.c.bf16 %v348, %v348
        %v350 = vld [vmem:[#allocation5] sm:$0xf]
        %v351 = vld [vmem:[#allocation5 + $0x4] sm:$0xf]
        %v352 = vld [vmem:[#allocation5 + $0x8] sm:$0xf]
        %v353 = vld [vmem:[#allocation5 + $0xc] sm:$0xf]
        %v354 = vld [vmem:[%s2] sm:$0x1]
        %v356 = vperm.slane %v354, 0
        %v362 = vunpack.c.l.b16 %v350
        %v363 = vunpack.c.l.b16 %v351
        %v364 = vunpack.c.l.b16 %v352
        %v365 = vunpack.c.l.b16 %v353
        %v366 = vpack.c.b16 %v363, %v362
        %v367 = vpack.c.b16 %v365, %v364
        %vm370 = vcmask 261120
        %v372 = vsel %vm370, %v349, 0
        %374 = vmatpush.bf16.msra.mxu0 0
        %375 = vmatpush.bf16.msra.mxu0 0
        %376 = vmatpush.bf16.msra.mxu0 0
        %377 = vmatpush.bf16.msra.mxu0 0
        %378 = vmatpush.bf16.msra.mxu0 0
        %379 = vmatpush.bf16.msra.mxu0 0
        %380 = vmatpush.bf16.msra.mxu0 %v367
        %381 = vmatpush.bf16.msra.mxu0 %v366
        %382 = vmatmul.bf16.gmra.mxu0 %v372
        %v383 = vpop.f32.mrf.mxu0
        %v384 = vadd.f32 %v356, %v383
        %v385 = vpop.f32.mrf.mxu0
        %386 = vdwg.mxu0
        %v387 = vpack.c.bf16 %v384, %v384
        %v388 = vxor.u32 %v387, 2147516416
        %v389 = vunpack.c.l.bf16 %v388
        %v390 = vmul.f32 %v389, 1.442695
        %v391 = vpow.pop %v390
        %v392 = vpack.c.bf16 %v391, %v391
        %v393 = vunpack.c.l.bf16 %v392
        %v394 = vadd.f32 %v393, 1.0
        %v395 = vpack.c.bf16 %v394, %v394
        %v396 = vunpack.c.h.bf16 1065369472
        %v397 = vunpack.c.l.bf16 1065369472
        %v398 = vunpack.c.h.bf16 %v395
        %v399 = vunpack.c.l.bf16 %v395
        %v400 = vrcp.pop %v398
        %v401 = vmul.f32 %v396, %v400
        %v402 = vrcp.pop %v399
        %v403 = vmul.f32 %v397, %v402
        %v404 = vpack.c.bf16 %v401, %v403
        %v405 = vld [vmem:[#allocation7] sm:$0xf]
        %v406 = vld [vmem:[#allocation7 + $0x4] sm:$0xf]
        %v407 = vld [vmem:[#allocation7 + $0x8] sm:$0xf]
        %v408 = vld [vmem:[#allocation7 + $0xc] sm:$0xf]
        %v409 = vld [vmem:[#allocation7 + $0x10] sm:$0xf]
        %v410 = vld [vmem:[#allocation7 + $0x14] sm:$0xf]
        %v411 = vld [vmem:[#allocation7 + $0x18] sm:$0xf]
        %v412 = vld [vmem:[#allocation7 + $0x1c] sm:$0xf]
        %v413 = vld [vmem:[#allocation7 + $0x20] sm:$0xf]
        %v414 = vld [vmem:[#allocation7 + $0x24] sm:$0xf]
        %v415 = vld [vmem:[#allocation7 + $0x28] sm:$0xf]
        %v416 = vld [vmem:[#allocation7 + $0x2c] sm:$0xf]
        %v417 = vld [vmem:[#allocation7 + $0x30] sm:$0xf]
        %v418 = vld [vmem:[#allocation7 + $0x34] sm:$0xf]
        %v419 = vld [vmem:[#allocation7 + $0x38] sm:$0xf]
        %v420 = vld [vmem:[#allocation7 + $0x3c] sm:$0xf]
        %v421 = vld [vmem:[%s4] sm:$0x1]
        %v423 = vperm.slane %v421, 0
        %v441 = vunpack.c.l.b16 %v405
        %v442 = vunpack.c.l.b16 %v406
        %v443 = vunpack.c.l.b16 %v407
        %v444 = vunpack.c.l.b16 %v408
        %v445 = vunpack.c.l.b16 %v409
        %v446 = vunpack.c.l.b16 %v410
        %v447 = vunpack.c.l.b16 %v411
        %v448 = vunpack.c.l.b16 %v412
        %v449 = vunpack.c.l.b16 %v413
        %v450 = vunpack.c.l.b16 %v414
        %v451 = vunpack.c.l.b16 %v415
        %v452 = vunpack.c.l.b16 %v416
        %v453 = vunpack.c.l.b16 %v417
        %v454 = vunpack.c.l.b16 %v418
        %v455 = vunpack.c.l.b16 %v419
        %v456 = vunpack.c.l.b16 %v420
        %v457 = vpack.c.b16 %v442, %v441
        %v458 = vpack.c.b16 %v444, %v443
        %v459 = vpack.c.b16 %v446, %v445
        %v460 = vpack.c.b16 %v448, %v447
        %v461 = vpack.c.b16 %v450, %v449
        %v462 = vpack.c.b16 %v452, %v451
        %v463 = vpack.c.b16 %v454, %v453
        %v464 = vpack.c.b16 %v456, %v455
        %473 = vmatpush.bf16.msra.mxu0 %v464
        %474 = vmatpush.bf16.msra.mxu0 %v463
        %475 = vmatpush.bf16.msra.mxu0 %v462
        %476 = vmatpush.bf16.msra.mxu0 %v461
        %477 = vmatpush.bf16.msra.mxu0 %v460
        %478 = vmatpush.bf16.msra.mxu0 %v459
        %479 = vmatpush.bf16.msra.mxu0 %v458
        %480 = vmatpush.bf16.msra.mxu0 %v457
        %481 = vmatmul.bf16.gmra.mxu0 %v404
        %v482 = vpop.f32.mrf.mxu0
        %v483 = vadd.f32 %v423, %v482
        %v484 = vpop.f32.mrf.mxu0
        %485 = vdwg.mxu0
        %v486 = vpack.c.bf16 %v483, %v483
        %v487 = vxor.u32 %v486, 2147516416
        %v488 = vunpack.c.l.bf16 %v487
        %v489 = vmul.f32 %v488, 1.442695
        %v490 = vpow.pop %v489
        %v491 = vpack.c.bf16 %v490, %v490
        %v492 = vunpack.c.l.bf16 %v491
        %v493 = vadd.f32 %v492, 1.0
        %v494 = vpack.c.bf16 %v493, %v493
        %v495 = vunpack.c.h.bf16 %v494
        %v496 = vunpack.c.l.bf16 %v494
        %v497 = vrcp.pop %v495
        %v498 = vmul.f32 %v396, %v497
        %v499 = vrcp.pop %v496
        %v500 = vmul.f32 %v397, %v499
        %v501 = vpack.c.bf16 %v498, %v500
        %v502 = vld [vmem:[#allocation8] sm:$0xf]
        %v503 = vld [vmem:[#allocation8 + $0x4] sm:$0xf]
        %v504 = vld [vmem:[#allocation8 + $0x8] sm:$0xf]
        %v505 = vld [vmem:[#allocation8 + $0xc] sm:$0xf]
        %v506 = vld [vmem:[#allocation8 + $0x10] sm:$0xf]
        %v507 = vld [vmem:[#allocation8 + $0x14] sm:$0xf]
        %v508 = vld [vmem:[#allocation8 + $0x18] sm:$0xf]
        %v509 = vld [vmem:[#allocation8 + $0x1c] sm:$0xf]
        %v510 = vld [vmem:[#allocation8 + $0x20] sm:$0xf]
        %v511 = vld [vmem:[#allocation8 + $0x24] sm:$0xf]
        %v512 = vld [vmem:[#allocation8 + $0x28] sm:$0xf]
        %v513 = vld [vmem:[#allocation8 + $0x2c] sm:$0xf]
        %v514 = vld [vmem:[#allocation8 + $0x30] sm:$0xf]
        %v515 = vld [vmem:[#allocation8 + $0x34] sm:$0xf]
        %v516 = vld [vmem:[#allocation8 + $0x38] sm:$0xf]
        %v517 = vld [vmem:[#allocation8 + $0x3c] sm:$0xf]
        %v518 = vld [vmem:[%s6] sm:$0x1]
        %v520 = vperm.slane %v518, 0
        %v538 = vunpack.c.l.b16 %v502
        %v539 = vunpack.c.l.b16 %v503
        %v540 = vunpack.c.l.b16 %v504
        %v541 = vunpack.c.l.b16 %v505
        %v542 = vunpack.c.l.b16 %v506
        %v543 = vunpack.c.l.b16 %v507
        %v544 = vunpack.c.l.b16 %v508
        %v545 = vunpack.c.l.b16 %v509
        %v546 = vunpack.c.l.b16 %v510
        %v547 = vunpack.c.l.b16 %v511
        %v548 = vunpack.c.l.b16 %v512
        %v549 = vunpack.c.l.b16 %v513
        %v550 = vunpack.c.l.b16 %v514
        %v551 = vunpack.c.l.b16 %v515
        %v552 = vunpack.c.l.b16 %v516
        %v553 = vunpack.c.l.b16 %v517
        %v554 = vpack.c.b16 %v539, %v538
        %v555 = vpack.c.b16 %v541, %v540
        %v556 = vpack.c.b16 %v543, %v542
        %v557 = vpack.c.b16 %v545, %v544
        %v558 = vpack.c.b16 %v547, %v546
        %v559 = vpack.c.b16 %v549, %v548
        %v560 = vpack.c.b16 %v551, %v550
        %v561 = vpack.c.b16 %v553, %v552
        %570 = vmatpush.bf16.msra.mxu0 %v561
        %571 = vmatpush.bf16.msra.mxu0 %v560
        %572 = vmatpush.bf16.msra.mxu0 %v559
        %573 = vmatpush.bf16.msra.mxu0 %v558
        %574 = vmatpush.bf16.msra.mxu0 %v557
        %575 = vmatpush.bf16.msra.mxu0 %v556
        %576 = vmatpush.bf16.msra.mxu0 %v555
        %577 = vmatpush.bf16.msra.mxu0 %v554
        %578 = vmatmul.bf16.gmra.mxu0 %v501
        %v579 = vpop.f32.mrf.mxu0
        %v580 = vadd.f32 %v520, %v579
        %v581 = vpop.f32.mrf.mxu0
        %582 = vdwg.mxu0
        %583 = vmax.xlane.f32.xlu0 %v580
        %v584 = vpop.xlane.xlu0 %583
        %v585 = vsub.f32 %v580, %v584
        %v586 = vmul.f32 %v585, 1.442695
        %v587 = vpow.pop %v586
        %588 = vadd.xlane.f32.xlu0 %v587
        %v589 = vpop.xlane.xlu0 %588
        %v590 = vlog2.pop %v589
        %v591 = vmul.f32 %v590, 0.6931472
        %v592 = vsub.f32 %v585, %v591
        %vm593 = vcmask 80896
        %594 = vst.msk [vmem:[%s345] sm:$0xff] %vm593, %v592
        %s595 = sand.u32 %s186, 1
        %s596 = scalar_lea.sflag [#allocation4], %s595
        %s597 = sand.u32 %s186, 1
        %s598 = smul.addr %s597, 8
        %s599 = scalar_lea.vmem [#allocation10], %s598
        // Predicated region
        $region65: #{tpu_custom_call.1} parent=47 // pred_check
          %p600 = pneg %p196
        $region66: #{tpu_custom_call.1} parent=47 // pred_check_branch
          %602 = sbr.rel (%p600) target = $region68
        $region67: #{tpu_custom_call.1} parent=47 // pred_region
          %604 = vsyncadd %s596, 0
          %s605 = smul.addr %s26, 8
          %s606 = scalar_lea.hbm %s7, %s605
          %s608 = sshll.u32 %s599, 4
          %s609 = int_to_ptr.vmem [resolvable:$true] %s608
          %s610 = sshll.u32 %s606, 4
          %s611 = int_to_ptr.hbm [resolvable:$true] %s610
          %613 = dma.vmem_to_hbm [thread:$0]  %s609, 128, %s611, %s596
        $region68: #{tpu_custom_call.1} parent=47 // pred_fallthru
          _
      $region48: #{tpu_custom_call.1} parent=5 // pred_fallthru
        _
      %p614 = scmp.le.s32.totalorder 2, %s21
      // Predicated region
      $region69: #{tpu_custom_call.1} parent=5 // pred_check
        %p615 = pneg %p614
      $region70: #{tpu_custom_call.1} parent=5 // pred_check_branch
        %617 = sbr.rel (%p615) target = $region72
      $region71: #{tpu_custom_call.1} parent=5 // pred_region
        %s618 = ssub.s32 %s21, 2
        // Predicated region
        $region73: #{tpu_custom_call.1} parent=71 // pred_check
          %p619 = pneg %p202
        $region74: #{tpu_custom_call.1} parent=71 // pred_check_branch
          %621 = sbr.rel (%p619) target = $region76
        $region75: #{tpu_custom_call.1} parent=71 // pred_region
          %s622 = sand.u32 %s187, 1
          %s623 = scalar_lea.sflag [#allocation4], %s622
          %s624 = sand.u32 %s187, 1
          %s625 = smul.addr %s624, 8
          %s626 = scalar_lea.vmem [#allocation10], %s625
          %628 = dma.done %s623, 128
        $region76: #{tpu_custom_call.1} parent=71 // pred_fallthru
          _
      $region72: #{tpu_custom_call.1} parent=5 // pred_fallthru
        _
    $region6: #{tpu_custom_call.1} parent=1 // loop_footer
      %s25 = sadd.s32 1, %s21
    $region7: #{tpu_custom_call.1} parent=1 // loop_footer_branch
      %20 = sbr.rel target = $region3
    $region8: #{tpu_custom_call.1} parent=1 // loop_exit
      _
    %629 = vsyncpa [#allocation3], 1
    %s630 = scalar_lea.sflag [#allocation3], 1
    %631 = vsyncpa %s630, 1
    %632 = vsyncpa [#allocation6], 1
    %633 = vsyncpa [#allocation9], 1
    %634 = vsyncpa [#allocation4], 1
    %s635 = scalar_lea.sflag [#allocation4], 1
    %636 = vsyncpa %s635, 1

</llo_original>
